<compile_context>
chip_gen: v6e
topology: v6e:2x2x1
jax: 0.10.0
libtpu: 0.0.40
codegen_flags: <defaults>
</compile_context>

<pallas_src>
import jax
import jax.numpy as jnp
from jax.experimental import pallas as pl
from jax.experimental.pallas import tpu as pltpu

# ---- model constants (module-level FEATURES / DROPOUT in the original) ----
CIN = 3             # image channels
H = W = 16          # spatial size (small test shape)
HW = H * W
KRAW = 9 * CIN      # 27 = im2col contraction dim (3x3 conv)
KPAD = 32           # zero-padded contraction dim (numerically exact)
FEATURE_DIM = 128   # feature_extractor.num_features (synthetic backbone)
FEATURES = 256      # hidden width of the classifier MLP
DROPOUT = 0.2       # unused at inference
NUM_AUX_INPUTS = 1  # unused (see TODO above)


def _camnet_kernel(patches_ref, pool_ref, wc_ref, bc_ref, w1_ref, b1_ref,
                   w2_ref, b2_ref, out_ref):
    """One batch tile of the CamNet forward (all compute on-chip).

    patches_ref : (TB*HW, KPAD)           bf16  im2col'd image tile
    pool_ref    : (TB, TB*HW)             bf16  block-diagonal mean-pool (1/HW)
    wc_ref      : (KPAD, FEATURE_DIM)     bf16  conv weight (as matmul)
    bc_ref      : (1, FEATURE_DIM)        f32   conv bias
    w1_ref      : (FEATURE_DIM, FEATURES) bf16, b1_ref: (1, FEATURES) f32
    w2_ref      : (1, FEATURES)           f32   transposed final Linear weight
    b2_ref      : (1, 1)                  f32
    out_ref     : (TB, 128)               f32   lane-dense output (col 0 = logit)
    """
    # 3x3 conv as ONE batched MXU matmul (bf16 operands, f32 accumulation).
    conv = jnp.dot(patches_ref[...], wc_ref[...],
                   preferred_element_type=jnp.float32)          # (TB*HW, F)
    conv = jnp.maximum(conv + bc_ref[...], 0.0)                 # bias + ReLU (f32)

    # Global average pool as an MXU matmul (pool rows already carry 1/HW;
    # 1/HW = 1/256 is an exact power of two in bf16).
    feat = jnp.dot(pool_ref[...], conv.astype(jnp.bfloat16),
                   preferred_element_type=jnp.float32)          # (TB, F)

    # Classifier: Linear -> ReLU -> (Dropout = identity at eval) -> Linear.
    h = jnp.dot(feat.astype(jnp.bfloat16), w1_ref[...],
                preferred_element_type=jnp.float32) + b1_ref[...]
    h = jnp.maximum(h, 0.0)                                     # (TB, FEATURES)

    # Final (FEATURES -> 1) layer in f32 as VPU multiply + cross-lane reduce
    # (XLU slot is free here); avoids a lane-width-1 MXU pass + masked stores.
    out = jnp.sum(h * w2_ref[...], axis=-1, keepdims=True) + b2_ref[...]  # (TB,1)
    # Lane-dense unmasked store: replicate the logit across all 128 lanes.
    out_ref[...] = jnp.broadcast_to(out, out_ref.shape).astype(out_ref.dtype)


def _im2col(image_nchw):
    """NCHW image -> (N, H*W, 9*CIN) patch matrix (3x3 conv, stride 1, pad 1)."""
    x = jnp.transpose(image_nchw, (0, 2, 3, 1))                 # NHWC
    n, h, w, c = x.shape
    xp = jnp.pad(x, ((0, 0), (1, 1), (1, 1), (0, 0)))
    cols = [xp[:, kh:kh + h, kw:kw + w, :] for kh in range(3) for kw in range(3)]
    patches = jnp.stack(cols, axis=3)                           # (N, H, W, 9, C)
    return patches.reshape(n, h * w, 9 * c)


def init_params(key):
    ks = jax.random.split(key, 6)
    wc = jax.random.normal(ks[0], (3, 3, CIN, FEATURE_DIM), jnp.float32)
    wc = wc * (1.0 / jnp.sqrt(9.0 * CIN))
    bc = 0.01 * jax.random.normal(ks[1], (1, FEATURE_DIM), jnp.float32)
    w1 = jax.random.normal(ks[2], (FEATURE_DIM, FEATURES), jnp.float32)
    w1 = w1 * (1.0 / jnp.sqrt(float(FEATURE_DIM)))
    b1 = 0.01 * jax.random.normal(ks[3], (1, FEATURES), jnp.float32)
    w2 = jax.random.normal(ks[4], (FEATURES, 1), jnp.float32)
    w2 = w2 * (1.0 / jnp.sqrt(float(FEATURES)))
    b2 = 0.01 * jax.random.normal(ks[5], (1, 1), jnp.float32)
    return dict(wc=wc, bc=bc, w1=w1, b1=b1, w2=w2, b2=b2)


def camnet_forward(params, inputs, *, tb=None):
    """Mirrors CamNet.forward: inputs = (image, scale) -> (binary_output, 0).

    tb = batch tile size (defaults to the full batch for small N — one grid
    step, minimal per-step overhead).  VMEM use per step is dominated by the
    f32 conv intermediate (tb*HW*FEATURE_DIM*4 B); tb <= 32 stays well inside
    the 64 MiB VMEM of a v7x TensorCore (128 MiB on v5e/v6e).
    """
    image, scale = inputs
    del scale  # unsqueezed but never used by the original forward (see TODO)

    n = image.shape[0]
    if tb is None:
        tb = n
    assert n % tb == 0, (n, tb)
    grid = (n // tb,)

    # ---- glue (plain JAX): im2col, K zero-pad 27->32, bf16 casts, reshapes ----
    patches = _im2col(image)                                    # (N, HW, 27) f32
    patches = jnp.pad(patches, ((0, 0), (0, 0), (0, KPAD - KRAW)))
    patches = patches.reshape(n * HW, KPAD).astype(jnp.bfloat16)

    wc = params["wc"].reshape(KRAW, FEATURE_DIM)
    wc = jnp.pad(wc, ((0, KPAD - KRAW), (0, 0))).astype(jnp.bfloat16)
    w1 = params["w1"].astype(jnp.bfloat16)
    w2_row = params["w2"].reshape(1, FEATURES)                  # f32 (VPU path)

    # Block-diagonal mean-pool matrix: pool @ relu(conv) == per-image mean.
    pool = (jnp.kron(jnp.eye(tb, dtype=jnp.float32),
                     jnp.ones((1, HW), jnp.float32)) / HW).astype(jnp.bfloat16)

    flops = (2 * n * HW * KPAD * FEATURE_DIM        # conv matmul
             + 2 * n * HW * FEATURE_DIM             # pooling matmul
             + 2 * n * FEATURE_DIM * FEATURES       # classifier layer 1
             + 2 * n * FEATURES)                    # classifier layer 2
    bytes_accessed = ((patches.size + wc.size + w1.size + pool.size) * 2
                      + (params["bc"].size + params["b1"].size
                         + w2_row.size + params["b2"].size) * 4
                      + n * 128 * 4)

    out_padded = pl.pallas_call(
        _camnet_kernel,
        out_shape=jax.ShapeDtypeStruct((n, 128), jnp.float32),
        grid=grid,
        in_specs=[
            pl.BlockSpec((tb * HW, KPAD), lambda i: (i, 0)),           # patches
            pl.BlockSpec((tb, tb * HW), lambda i: (0, 0)),             # pool
            pl.BlockSpec((KPAD, FEATURE_DIM), lambda i: (0, 0)),       # wc
            pl.BlockSpec((1, FEATURE_DIM), lambda i: (0, 0)),          # bc
            pl.BlockSpec((FEATURE_DIM, FEATURES), lambda i: (0, 0)),   # w1
            pl.BlockSpec((1, FEATURES), lambda i: (0, 0)),             # b1
            pl.BlockSpec((1, FEATURES), lambda i: (0, 0)),             # w2 row
            pl.BlockSpec((1, 1), lambda i: (0, 0)),                    # b2
        ],
        out_specs=pl.BlockSpec((tb, 128), lambda i: (i, 0)),
        compiler_params=pltpu.CompilerParams(
            dimension_semantics=("parallel",)),
        cost_estimate=pl.CostEstimate(
            flops=flops, transcendentals=0, bytes_accessed=bytes_accessed),
    )(patches, pool, wc, params["bc"], w1, params["b1"], w2_row, params["b2"])

    binary_output = out_padded[:, :1]                           # (N, 1) slice glue
    return binary_output, 0


def camnet_reference(params, inputs):
    """Pure-JAX f32 reference of the same math, for validation."""
    image, _ = inputs
    patches = _im2col(image)                                    # (N, HW, 27)
    wc = params["wc"].reshape(KRAW, FEATURE_DIM)
    conv = jnp.maximum(
        jnp.einsum("npk,kf->npf", patches, wc) + params["bc"], 0.0)
    feat = jnp.mean(conv, axis=1)                               # (N, FEATURE_DIM)
    h = jnp.maximum(feat @ params["w1"] + params["b1"], 0.0)
    return h @ params["w2"] + params["b2"], 0


if __name__ == "__main__":
    key = jax.random.PRNGKey(0)
    k_img, k_scale, k_param = jax.random.split(key, 3)

    image = jax.random.normal(k_img, (2, CIN, H, W), jnp.float32)   # NCHW
    scale = jax.random.normal(k_scale, (2,), jnp.float32)
    params = init_params(k_param)

    out, aux = camnet_forward(params, (image, scale))           # tb defaults to N
    out = jax.block_until_ready(out)

    ref, _ = camnet_reference(params, (image, scale))
    assert out.shape == (2, 1), out.shape
    assert aux == 0
    # bf16 MXU operands (f32 accumulation) vs f32 reference -> loosened tolerance.
    assert jnp.allclose(out, ref, atol=5e-2, rtol=5e-2), (out, ref)
    print("KERNEL_OK")
</pallas_src>

<mosaic_0001>
module attributes {stable_mosaic.version = 11 : i64} {
  func.func @_camnet_kernel(%arg0: i32, %arg1: memref<512x32xbf16, #tpu.memory_space<vmem>>, %arg2: memref<2x512xbf16, #tpu.memory_space<vmem>>, %arg3: memref<32x128xbf16, #tpu.memory_space<vmem>>, %arg4: memref<1x128xf32, #tpu.memory_space<vmem>>, %arg5: memref<128x256xbf16, #tpu.memory_space<vmem>>, %arg6: memref<1x256xf32, #tpu.memory_space<vmem>>, %arg7: memref<1x256xf32, #tpu.memory_space<vmem>>, %arg8: memref<1x1xf32, #tpu.memory_space<vmem>>, %arg9: memref<2x128xf32, #tpu.memory_space<vmem>>) attributes {dimension_semantics = [#tpu.dimension_semantics<parallel>], iteration_bounds = array<i64: 1>, scalar_prefetch = 0 : i64, scratch_operands = 0 : i64, tpu.core_type = #tpu.core_type<tc>, window_params = [{transform_indices = @transform_0, window_bounds = array<i64: 512, 32>}, {pipeline_mode = #tpu.pipeline_mode<synchronous>, transform_indices = @transform_1, window_bounds = array<i64: 2, 512>}, {pipeline_mode = #tpu.pipeline_mode<synchronous>, transform_indices = @transform_2, window_bounds = array<i64: 32, 128>}, {pipeline_mode = #tpu.pipeline_mode<synchronous>, transform_indices = @transform_3, window_bounds = array<i64: 1, 128>}, {pipeline_mode = #tpu.pipeline_mode<synchronous>, transform_indices = @transform_4, window_bounds = array<i64: 128, 256>}, {pipeline_mode = #tpu.pipeline_mode<synchronous>, transform_indices = @transform_5, window_bounds = array<i64: 1, 256>}, {pipeline_mode = #tpu.pipeline_mode<synchronous>, transform_indices = @transform_6, window_bounds = array<i64: 1, 256>}, {pipeline_mode = #tpu.pipeline_mode<synchronous>, transform_indices = @transform_7, window_bounds = array<i64: 1, 1>}, {transform_indices = @transform_8, window_bounds = array<i64: 2, 128>}]} {
    %c0 = arith.constant 0 : index
    %c0_0 = arith.constant 0 : index
    %0 = vector.load %arg1[%c0, %c0_0] : memref<512x32xbf16, #tpu.memory_space<vmem>>, vector<512x32xbf16>
    %c0_1 = arith.constant 0 : index
    %c0_2 = arith.constant 0 : index
    %1 = vector.load %arg3[%c0_1, %c0_2] : memref<32x128xbf16, #tpu.memory_space<vmem>>, vector<32x128xbf16>
    %cst = arith.constant dense<0.000000e+00> : vector<512x128xf32>
    %2 = tpu.matmul %0, %1, %cst {dimension_numbers = #tpu.dot_dimension_numbers<[1], [0], [0], [1], [0, 0, 1, 1], [], []>} : vector<512x32xbf16>, vector<32x128xbf16>, vector<512x128xf32> -> vector<512x128xf32>
    %c0_3 = arith.constant 0 : index
    %c0_4 = arith.constant 0 : index
    %3 = vector.load %arg4[%c0_3, %c0_4] : memref<1x128xf32, #tpu.memory_space<vmem>>, vector<1x128xf32>
    %4 = vector.broadcast %3 : vector<1x128xf32> to vector<512x128xf32>
    %5 = arith.addf %2, %4 : vector<512x128xf32>
    %cst_5 = arith.constant 0.000000e+00 : f32
    %6 = vector.broadcast %cst_5 : f32 to vector<512x128xf32>
    %7 = arith.maximumf %5, %6 : vector<512x128xf32>
    %c0_6 = arith.constant 0 : index
    %c0_7 = arith.constant 0 : index
    %8 = vector.load %arg2[%c0_6, %c0_7] : memref<2x512xbf16, #tpu.memory_space<vmem>>, vector<2x512xbf16>
    %9 = arith.truncf %7 : vector<512x128xf32> to vector<512x128xbf16>
    %cst_8 = arith.constant dense<0.000000e+00> : vector<2x128xf32>
    %10 = tpu.matmul %8, %9, %cst_8 {dimension_numbers = #tpu.dot_dimension_numbers<[1], [0], [0], [1], [0, 0, 1, 1], [], []>} : vector<2x512xbf16>, vector<512x128xbf16>, vector<2x128xf32> -> vector<2x128xf32>
    %11 = arith.truncf %10 : vector<2x128xf32> to vector<2x128xbf16>
    %c0_9 = arith.constant 0 : index
    %c0_10 = arith.constant 0 : index
    %12 = vector.load %arg5[%c0_9, %c0_10] : memref<128x256xbf16, #tpu.memory_space<vmem>>, vector<128x256xbf16>
    %cst_11 = arith.constant dense<0.000000e+00> : vector<2x256xf32>
    %13 = tpu.matmul %11, %12, %cst_11 {dimension_numbers = #tpu.dot_dimension_numbers<[1], [0], [0], [1], [0, 0, 1, 1], [], []>} : vector<2x128xbf16>, vector<128x256xbf16>, vector<2x256xf32> -> vector<2x256xf32>
    %c0_12 = arith.constant 0 : index
    %c0_13 = arith.constant 0 : index
    %14 = vector.load %arg6[%c0_12, %c0_13] : memref<1x256xf32, #tpu.memory_space<vmem>>, vector<1x256xf32>
    %15 = vector.broadcast %14 : vector<1x256xf32> to vector<2x256xf32>
    %16 = arith.addf %13, %15 : vector<2x256xf32>
    %cst_14 = arith.constant 0.000000e+00 : f32
    %17 = vector.broadcast %cst_14 : f32 to vector<2x256xf32>
    %18 = arith.maximumf %16, %17 : vector<2x256xf32>
    %c0_15 = arith.constant 0 : index
    %c0_16 = arith.constant 0 : index
    %19 = vector.load %arg7[%c0_15, %c0_16] : memref<1x256xf32, #tpu.memory_space<vmem>>, vector<1x256xf32>
    %20 = vector.broadcast %19 : vector<1x256xf32> to vector<2x256xf32>
    %21 = arith.mulf %18, %20 : vector<2x256xf32>
    %cst_17 = arith.constant dense<0.000000e+00> : vector<2xf32>
    %22 = vector.multi_reduction <add>, %21, %cst_17 [1] : vector<2x256xf32> to vector<2xf32>
    %23 = vector.shape_cast %22 : vector<2xf32> to vector<2x1xf32>
    %c0_18 = arith.constant 0 : index
    %c0_19 = arith.constant 0 : index
    %24 = vector.load %arg8[%c0_18, %c0_19] : memref<1x1xf32, #tpu.memory_space<vmem>>, vector<1x1xf32>
    %25 = vector.broadcast %24 : vector<1x1xf32> to vector<2x1xf32>
    %26 = arith.addf %23, %25 : vector<2x1xf32>
    %27 = vector.shape_cast %26 : vector<2x1xf32> to vector<2x1xf32>
    %28 = vector.broadcast %27 : vector<2x1xf32> to vector<2x128xf32>
    %c0_20 = arith.constant 0 : index
    %c0_21 = arith.constant 0 : index
    %29 = vector.load %arg9[%c0_20, %c0_21] : memref<2x128xf32, #tpu.memory_space<vmem>>, vector<2x128xf32>
    tpu.vector_store %arg9[%c0_20, %c0_21], %28 {strides = array<i32>} : memref<2x128xf32, #tpu.memory_space<vmem>>, vector<2x128xf32>,
    return
  }
  func.func @transform_0(%arg0: i32) -> (i32, i32) {
    %c0_i32 = arith.constant 0 : i32
    %c0_i32_0 = arith.constant 0 : i32
    return %arg0, %c0_i32 : i32, i32
  }
  func.func @transform_1(%arg0: i32) -> (i32, i32) {
    %c0_i32 = arith.constant 0 : i32
    %c0_i32_0 = arith.constant 0 : i32
    %c0_i32_1 = arith.constant 0 : i32
    return %c0_i32, %c0_i32_0 : i32, i32
  }
  func.func @transform_2(%arg0: i32) -> (i32, i32) {
    %c0_i32 = arith.constant 0 : i32
    %c0_i32_0 = arith.constant 0 : i32
    %c0_i32_1 = arith.constant 0 : i32
    return %c0_i32, %c0_i32_0 : i32, i32
  }
  func.func @transform_3(%arg0: i32) -> (i32, i32) {
    %c0_i32 = arith.constant 0 : i32
    %c0_i32_0 = arith.constant 0 : i32
    %c0_i32_1 = arith.constant 0 : i32
    return %c0_i32, %c0_i32_0 : i32, i32
  }
  func.func @transform_4(%arg0: i32) -> (i32, i32) {
    %c0_i32 = arith.constant 0 : i32
    %c0_i32_0 = arith.constant 0 : i32
    %c0_i32_1 = arith.constant 0 : i32
    return %c0_i32, %c0_i32_0 : i32, i32
  }
  func.func @transform_5(%arg0: i32) -> (i32, i32) {
    %c0_i32 = arith.constant 0 : i32
    %c0_i32_0 = arith.constant 0 : i32
    %c0_i32_1 = arith.constant 0 : i32
    return %c0_i32, %c0_i32_0 : i32, i32
  }
  func.func @transform_6(%arg0: i32) -> (i32, i32) {
    %c0_i32 = arith.constant 0 : i32
    %c0_i32_0 = arith.constant 0 : i32
    %c0_i32_1 = arith.constant 0 : i32
    return %c0_i32, %c0_i32_0 : i32, i32
  }
  func.func @transform_7(%arg0: i32) -> (i32, i32) {
    %c0_i32 = arith.constant 0 : i32
    %c0_i32_0 = arith.constant 0 : i32
    %c0_i32_1 = arith.constant 0 : i32
    return %c0_i32, %c0_i32_0 : i32, i32
  }
  func.func @transform_8(%arg0: i32) -> (i32, i32) {
    %c0_i32 = arith.constant 0 : i32
    %c0_i32_0 = arith.constant 0 : i32
    return %arg0, %c0_i32 : i32, i32
  }
}

</mosaic_0001>

<llo_original>
// kernel: tpu_custom_call.1
$region0: #{tpu_custom_call.1}
  #allocation0 [shape = 'u32[]', space=smem, size = 0x4, offset = 0x4, fixed_abs, tag = 'smem constant byte address 0x4 - core index']
  #allocation1 [shape = 'u32[144,128]{1,0:T(1,128)}', space=vmem, size = 0x12000, scoped, tag = 'internal scratch']
  #allocation2 [shape = 'f32[1,1]{1,0:T(1,128)S(1)}', space=vmem, size = 0x200, scoped, tag = 'scoped memory for tpu_custom_call.1']
  %s0 = inlined_call_operand.vmem [shape: bf16[512,32], index: 0, kind: input, shape index: {}]
  %s1 = inlined_call_operand.vmem [shape: bf16[2,512], index: 1, kind: input, shape index: {}]
  %s2 = inlined_call_operand.vmem [shape: bf16[32,128], index: 2, kind: input, shape index: {}]
  %s3 = inlined_call_operand.vmem [shape: f32[1,128], index: 3, kind: input, shape index: {}]
  %s4 = inlined_call_operand.vmem [shape: bf16[128,256], index: 4, kind: input, shape index: {}]
  %s5 = inlined_call_operand.vmem [shape: f32[1,256], index: 5, kind: input, shape index: {}]
  %s6 = inlined_call_operand.vmem [shape: f32[1,256], index: 6, kind: input, shape index: {}]
  %s7 = inlined_call_operand.<no memory space> [shape: f32[1,1], index: 7, kind: input, shape index: {}]
  %s8 = inlined_call_operand.hbm [shape: f32[2,128], index: 8, kind: output, shape index: {}]
  %s9 = sld [smem:[#allocation0]]
  $region42: #{tpu_custom_call.1} parent=0
    _
  %s11 = ssub.s32 1, %s9
  %s12 = scalar_select 0, %s11, %s9
  %v13 = vstv %s7
  %14 = vst [vmem:[#allocation2] sm:$0x1] %v13
  $region1: #{tpu_custom_call.1} parent=0
    #allocation3 [shape = 'u8[1024]{0}', space=vmem, size = 0x400, scoped, tag = 'output window, operand 0, single buffered']
    #allocation4 [shape = 's32[1]{0}', space=sflag, size = 0x4, scoped, tag = 'scoped memory for tpu_custom_call.1']
    %15 = vsyncpa [#allocation4], 0
    // Predicated region
    $region2: #{tpu_custom_call.1} parent=1 // pred_check
      _
    $region3: #{tpu_custom_call.1} parent=1 // pred_check_branch
      %17 = sbr.rel (0) target = $region5
    $region4: #{tpu_custom_call.1} parent=1 // pred_region
      _
    $region5: #{tpu_custom_call.1} parent=1 // pred_fallthru
      _
    // Predicated region
    $region6: #{tpu_custom_call.1} parent=1 // pred_check
      _
    $region7: #{tpu_custom_call.1} parent=1 // pred_check_branch
      %19 = sbr.rel (0) target = $region9
    $region8: #{tpu_custom_call.1} parent=1 // pred_region
      _
    $region9: #{tpu_custom_call.1} parent=1 // pred_fallthru
      _
    // Predicated region
    $region10: #{tpu_custom_call.1} parent=1 // pred_check
      _
    $region11: #{tpu_custom_call.1} parent=1 // pred_check_branch
      %21 = sbr.rel (0) target = $region13
    $region12: #{tpu_custom_call.1} parent=1 // pred_region
      _
    $region13: #{tpu_custom_call.1} parent=1 // pred_fallthru
      _
    // Predicated region
    $region14: #{tpu_custom_call.1} parent=1 // pred_check
      _
    $region15: #{tpu_custom_call.1} parent=1 // pred_check_branch
      %23 = sbr.rel (0) target = $region17
    $region16: #{tpu_custom_call.1} parent=1 // pred_region
      _
    $region17: #{tpu_custom_call.1} parent=1 // pred_fallthru
      _
    // Predicated region
    $region18: #{tpu_custom_call.1} parent=1 // pred_check
      _
    $region19: #{tpu_custom_call.1} parent=1 // pred_check_branch
      %25 = sbr.rel (0) target = $region21
    $region20: #{tpu_custom_call.1} parent=1 // pred_region
      _
    $region21: #{tpu_custom_call.1} parent=1 // pred_fallthru
      _
    // Predicated region
    $region22: #{tpu_custom_call.1} parent=1 // pred_check
      _
    $region23: #{tpu_custom_call.1} parent=1 // pred_check_branch
      %27 = sbr.rel (0) target = $region25
    $region24: #{tpu_custom_call.1} parent=1 // pred_region
      _
    $region25: #{tpu_custom_call.1} parent=1 // pred_fallthru
      _
    // Predicated region
    $region26: #{tpu_custom_call.1} parent=1 // pred_check
      _
    $region27: #{tpu_custom_call.1} parent=1 // pred_check_branch
      %29 = sbr.rel (0) target = $region29
    $region28: #{tpu_custom_call.1} parent=1 // pred_region
      _
    $region29: #{tpu_custom_call.1} parent=1 // pred_fallthru
      _
    // Predicated region
    $region30: #{tpu_custom_call.1} parent=1 // pred_check
      _
    $region31: #{tpu_custom_call.1} parent=1 // pred_check_branch
      %31 = sbr.rel (0) target = $region33
    $region32: #{tpu_custom_call.1} parent=1 // pred_region
      _
    $region33: #{tpu_custom_call.1} parent=1 // pred_fallthru
      _
    %v33 = vld [vmem:[%s0] sm:$0xf]
    %v34 = vld [vmem:[%s0 + $0x4] sm:$0xf]
    %v35 = vld [vmem:[%s0 + $0x8] sm:$0xf]
    %v36 = vld [vmem:[%s0 + $0xc] sm:$0xf]
    %v37 = vld [vmem:[%s0 + $0x10] sm:$0xf]
    %v38 = vld [vmem:[%s0 + $0x14] sm:$0xf]
    %v39 = vld [vmem:[%s0 + $0x18] sm:$0xf]
    %v40 = vld [vmem:[%s0 + $0x1c] sm:$0xf]
    %v41 = vld [vmem:[%s0 + $0x20] sm:$0xf]
    %v42 = vld [vmem:[%s0 + $0x24] sm:$0xf]
    %v43 = vld [vmem:[%s0 + $0x28] sm:$0xf]
    %v44 = vld [vmem:[%s0 + $0x2c] sm:$0xf]
    %v45 = vld [vmem:[%s0 + $0x30] sm:$0xf]
    %v46 = vld [vmem:[%s0 + $0x34] sm:$0xf]
    %v47 = vld [vmem:[%s0 + $0x38] sm:$0xf]
    %v48 = vld [vmem:[%s0 + $0x3c] sm:$0xf]
    %v49 = vld [vmem:[%s0 + $0x40] sm:$0xf]
    %v50 = vld [vmem:[%s0 + $0x44] sm:$0xf]
    %v51 = vld [vmem:[%s0 + $0x48] sm:$0xf]
    %v52 = vld [vmem:[%s0 + $0x4c] sm:$0xf]
    %v53 = vld [vmem:[%s0 + $0x50] sm:$0xf]
    %v54 = vld [vmem:[%s0 + $0x54] sm:$0xf]
    %v55 = vld [vmem:[%s0 + $0x58] sm:$0xf]
    %v56 = vld [vmem:[%s0 + $0x5c] sm:$0xf]
    %v57 = vld [vmem:[%s0 + $0x60] sm:$0xf]
    %v58 = vld [vmem:[%s0 + $0x64] sm:$0xf]
    %v59 = vld [vmem:[%s0 + $0x68] sm:$0xf]
    %v60 = vld [vmem:[%s0 + $0x6c] sm:$0xf]
    %v61 = vld [vmem:[%s0 + $0x70] sm:$0xf]
    %v62 = vld [vmem:[%s0 + $0x74] sm:$0xf]
    %v63 = vld [vmem:[%s0 + $0x78] sm:$0xf]
    %v64 = vld [vmem:[%s0 + $0x7c] sm:$0xf]
    %v65 = vld [vmem:[%s0 + $0x80] sm:$0xf]
    %v66 = vld [vmem:[%s0 + $0x84] sm:$0xf]
    %v67 = vld [vmem:[%s0 + $0x88] sm:$0xf]
    %v68 = vld [vmem:[%s0 + $0x8c] sm:$0xf]
    %v69 = vld [vmem:[%s0 + $0x90] sm:$0xf]
    %v70 = vld [vmem:[%s0 + $0x94] sm:$0xf]
    %v71 = vld [vmem:[%s0 + $0x98] sm:$0xf]
    %v72 = vld [vmem:[%s0 + $0x9c] sm:$0xf]
    %v73 = vld [vmem:[%s0 + $0xa0] sm:$0xf]
    %v74 = vld [vmem:[%s0 + $0xa4] sm:$0xf]
    %v75 = vld [vmem:[%s0 + $0xa8] sm:$0xf]
    %v76 = vld [vmem:[%s0 + $0xac] sm:$0xf]
    %v77 = vld [vmem:[%s0 + $0xb0] sm:$0xf]
    %v78 = vld [vmem:[%s0 + $0xb4] sm:$0xf]
    %v79 = vld [vmem:[%s0 + $0xb8] sm:$0xf]
    %v80 = vld [vmem:[%s0 + $0xbc] sm:$0xf]
    %v81 = vld [vmem:[%s0 + $0xc0] sm:$0xf]
    %v82 = vld [vmem:[%s0 + $0xc4] sm:$0xf]
    %v83 = vld [vmem:[%s0 + $0xc8] sm:$0xf]
    %v84 = vld [vmem:[%s0 + $0xcc] sm:$0xf]
    %v85 = vld [vmem:[%s0 + $0xd0] sm:$0xf]
    %v86 = vld [vmem:[%s0 + $0xd4] sm:$0xf]
    %v87 = vld [vmem:[%s0 + $0xd8] sm:$0xf]
    %v88 = vld [vmem:[%s0 + $0xdc] sm:$0xf]
    %v89 = vld [vmem:[%s0 + $0xe0] sm:$0xf]
    %v90 = vld [vmem:[%s0 + $0xe4] sm:$0xf]
    %v91 = vld [vmem:[%s0 + $0xe8] sm:$0xf]
    %v92 = vld [vmem:[%s0 + $0xec] sm:$0xf]
    %v93 = vld [vmem:[%s0 + $0xf0] sm:$0xf]
    %v94 = vld [vmem:[%s0 + $0xf4] sm:$0xf]
    %v95 = vld [vmem:[%s0 + $0xf8] sm:$0xf]
    %v96 = vld [vmem:[%s0 + $0xfc] sm:$0xf]
    %v97 = vld [vmem:[%s2] sm:$0xf]
    %v98 = vld [vmem:[%s2 + $0x4] sm:$0xf]
    %v99 = vld [vmem:[%s2 + $0x8] sm:$0xf]
    %v100 = vld [vmem:[%s2 + $0xc] sm:$0xf]
    %v101 = vld [vmem:[%s3] sm:$0x1]
    %v103 = vlaneseq
    %v104 = vshrl.u32 %v103, 7
    %v105 = vsub.s32 0, %v104
    %v106 = vrot.slane %v101, %v105
    %v172 = vunpack.c.l.b16 %v33
    %v173 = vunpack.c.l.b16 %v34
    %v174 = vunpack.c.l.b16 %v35
    %v175 = vunpack.c.l.b16 %v36
    %v176 = vunpack.c.l.b16 %v37
    %v177 = vunpack.c.l.b16 %v38
    %v178 = vunpack.c.l.b16 %v39
    %v179 = vunpack.c.l.b16 %v40
    %v180 = vunpack.c.l.b16 %v41
    %v181 = vunpack.c.l.b16 %v42
    %v182 = vunpack.c.l.b16 %v43
    %v183 = vunpack.c.l.b16 %v44
    %v184 = vunpack.c.l.b16 %v45
    %v185 = vunpack.c.l.b16 %v46
    %v186 = vunpack.c.l.b16 %v47
    %v187 = vunpack.c.l.b16 %v48
    %v188 = vunpack.c.l.b16 %v49
    %v189 = vunpack.c.l.b16 %v50
    %v190 = vunpack.c.l.b16 %v51
    %v191 = vunpack.c.l.b16 %v52
    %v192 = vunpack.c.l.b16 %v53
    %v193 = vunpack.c.l.b16 %v54
    %v194 = vunpack.c.l.b16 %v55
    %v195 = vunpack.c.l.b16 %v56
    %v196 = vunpack.c.l.b16 %v57
    %v197 = vunpack.c.l.b16 %v58
    %v198 = vunpack.c.l.b16 %v59
    %v199 = vunpack.c.l.b16 %v60
    %v200 = vunpack.c.l.b16 %v61
    %v201 = vunpack.c.l.b16 %v62
    %v202 = vunpack.c.l.b16 %v63
    %v203 = vunpack.c.l.b16 %v64
    %v204 = vunpack.c.l.b16 %v65
    %v205 = vunpack.c.l.b16 %v66
    %v206 = vunpack.c.l.b16 %v67
    %v207 = vunpack.c.l.b16 %v68
    %v208 = vunpack.c.l.b16 %v69
    %v209 = vunpack.c.l.b16 %v70
    %v210 = vunpack.c.l.b16 %v71
    %v211 = vunpack.c.l.b16 %v72
    %v212 = vunpack.c.l.b16 %v73
    %v213 = vunpack.c.l.b16 %v74
    %v214 = vunpack.c.l.b16 %v75
    %v215 = vunpack.c.l.b16 %v76
    %v216 = vunpack.c.l.b16 %v77
    %v217 = vunpack.c.l.b16 %v78
    %v218 = vunpack.c.l.b16 %v79
    %v219 = vunpack.c.l.b16 %v80
    %v220 = vunpack.c.l.b16 %v81
    %v221 = vunpack.c.l.b16 %v82
    %v222 = vunpack.c.l.b16 %v83
    %v223 = vunpack.c.l.b16 %v84
    %v224 = vunpack.c.l.b16 %v85
    %v225 = vunpack.c.l.b16 %v86
    %v226 = vunpack.c.l.b16 %v87
    %v227 = vunpack.c.l.b16 %v88
    %v228 = vunpack.c.l.b16 %v89
    %v229 = vunpack.c.l.b16 %v90
    %v230 = vunpack.c.l.b16 %v91
    %v231 = vunpack.c.l.b16 %v92
    %v232 = vunpack.c.l.b16 %v93
    %v233 = vunpack.c.l.b16 %v94
    %v234 = vunpack.c.l.b16 %v95
    %v235 = vunpack.c.l.b16 %v96
    %v236 = vpack.c.b16 %v173, %v172
    %v237 = vpack.c.b16 %v175, %v174
    %v238 = vpack.c.b16 %v177, %v176
    %v239 = vpack.c.b16 %v179, %v178
    %v240 = vpack.c.b16 %v181, %v180
    %v241 = vpack.c.b16 %v183, %v182
    %v242 = vpack.c.b16 %v185, %v184
    %v243 = vpack.c.b16 %v187, %v186
    %v244 = vpack.c.b16 %v189, %v188
    %v245 = vpack.c.b16 %v191, %v190
    %v246 = vpack.c.b16 %v193, %v192
    %v247 = vpack.c.b16 %v195, %v194
    %v248 = vpack.c.b16 %v197, %v196
    %v249 = vpack.c.b16 %v199, %v198
    %v250 = vpack.c.b16 %v201, %v200
    %v251 = vpack.c.b16 %v203, %v202
    %v252 = vpack.c.b16 %v205, %v204
    %v253 = vpack.c.b16 %v207, %v206
    %v254 = vpack.c.b16 %v209, %v208
    %v255 = vpack.c.b16 %v211, %v210
    %v256 = vpack.c.b16 %v213, %v212
    %v257 = vpack.c.b16 %v215, %v214
    %v258 = vpack.c.b16 %v217, %v216
    %v259 = vpack.c.b16 %v219, %v218
    %v260 = vpack.c.b16 %v221, %v220
    %v261 = vpack.c.b16 %v223, %v222
    %v262 = vpack.c.b16 %v225, %v224
    %v263 = vpack.c.b16 %v227, %v226
    %v264 = vpack.c.b16 %v229, %v228
    %v265 = vpack.c.b16 %v231, %v230
    %v266 = vpack.c.b16 %v233, %v232
    %v267 = vpack.c.b16 %v235, %v234
    %v272 = vunpack.c.l.b16 %v97
    %v273 = vunpack.c.l.b16 %v98
    %v274 = vunpack.c.l.b16 %v99
    %v275 = vunpack.c.l.b16 %v100
    %v276 = vpack.c.b16 %v273, %v272
    %v277 = vpack.c.b16 %v275, %v274
    %vm280 = vcmask 261120
    %v282 = vsel %vm280, %v236, 0
    %v285 = vsel %vm280, %v237, 0
    %v288 = vsel %vm280, %v238, 0
    %v291 = vsel %vm280, %v239, 0
    %v294 = vsel %vm280, %v240, 0
    %v297 = vsel %vm280, %v241, 0
    %v300 = vsel %vm280, %v242, 0
    %v303 = vsel %vm280, %v243, 0
    %v306 = vsel %vm280, %v244, 0
    %v309 = vsel %vm280, %v245, 0
    %v312 = vsel %vm280, %v246, 0
    %v315 = vsel %vm280, %v247, 0
    %v318 = vsel %vm280, %v248, 0
    %v321 = vsel %vm280, %v249, 0
    %v324 = vsel %vm280, %v250, 0
    %v327 = vsel %vm280, %v251, 0
    %v330 = vsel %vm280, %v252, 0
    %v333 = vsel %vm280, %v253, 0
    %v336 = vsel %vm280, %v254, 0
    %v339 = vsel %vm280, %v255, 0
    %v342 = vsel %vm280, %v256, 0
    %v345 = vsel %vm280, %v257, 0
    %v348 = vsel %vm280, %v258, 0
    %v351 = vsel %vm280, %v259, 0
    %v354 = vsel %vm280, %v260, 0
    %v357 = vsel %vm280, %v261, 0
    %v360 = vsel %vm280, %v262, 0
    %v363 = vsel %vm280, %v263, 0
    %v366 = vsel %vm280, %v264, 0
    %v369 = vsel %vm280, %v265, 0
    %v372 = vsel %vm280, %v266, 0
    %v375 = vsel %vm280, %v267, 0
    %377 = vmatprep.subr.bf16.mxu0 0
    %378 = vmatpush1.bf16.msra.mxu0 0
    %379 = vmatprep.subr.bf16.mxu0 0
    %380 = vmatpush1.bf16.msra.mxu0 0
    %381 = vmatprep.subr.bf16.mxu0 0
    %382 = vmatpush1.bf16.msra.mxu0 0
    %383 = vmatprep.subr.bf16.mxu0 0
    %384 = vmatpush1.bf16.msra.mxu0 0
    %385 = vmatprep.subr.bf16.mxu0 0
    %386 = vmatpush1.bf16.msra.mxu0 0
    %387 = vmatprep.subr.bf16.mxu0 0
    %388 = vmatpush1.bf16.msra.mxu0 0
    %389 = vmatprep.subr.bf16.mxu0 0
    %390 = vmatpush1.bf16.msra.mxu0 %v277
    %391 = vmatprep.subr.bf16.mxu0 0
    %392 = vmatpush1.bf16.msra.mxu0 %v276
    %393 = vmatprep.subr.bf16.mxu0 0
    %394 = vmatpush2.bf16.msra.mxu0 0
    %395 = vmatprep.subr.bf16.mxu0 0
    %396 = vmatpush2.bf16.msra.mxu0 0
    %397 = vmatprep.subr.bf16.mxu0 0
    %398 = vmatpush2.bf16.msra.mxu0 0
    %399 = vmatprep.subr.bf16.mxu0 0
    %400 = vmatpush2.bf16.msra.mxu0 0
    %401 = vmatprep.subr.bf16.mxu0 0
    %402 = vmatpush2.bf16.msra.mxu0 0
    %403 = vmatprep.subr.bf16.mxu0 0
    %404 = vmatpush2.bf16.msra.mxu0 0
    %405 = vmatprep.subr.bf16.mxu0 0
    %406 = vmatpush2.bf16.msra.mxu0 0
    %407 = vmatprep.subr.bf16.mxu0 0
    %408 = vmatpush2.bf16.msra.mxu0 0
    %409 = vmatprep.mubr.bf16.mxu0 0
    %410 = vmatmul.mubr.bf16.gmra.mxu0 %v282
    %v411 = vpop.f32.mrf.mxu0
    %v412 = vadd.f32 %v106, %v411
    %v413 = vpop.f32.mrf.mxu0
    %v414 = vpop.f32.mrf.mxu0
    %v415 = vadd.f32 %v106, %v414
    %v416 = vpop.f32.mrf.mxu0
    %417 = vmatprep.mubr.bf16.mxu0 0
    %418 = vmatmul.mubr.bf16.gmra.mxu0 %v285
    %v419 = vpop.f32.mrf.mxu0
    %v420 = vadd.f32 %v106, %v419
    %v421 = vpop.f32.mrf.mxu0
    %v422 = vpop.f32.mrf.mxu0
    %v423 = vadd.f32 %v106, %v422
    %v424 = vpop.f32.mrf.mxu0
    %425 = vmatprep.mubr.bf16.mxu0 0
    %426 = vmatmul.mubr.bf16.gmra.mxu0 %v288
    %v427 = vpop.f32.mrf.mxu0
    %v428 = vadd.f32 %v106, %v427
    %v429 = vpop.f32.mrf.mxu0
    %v430 = vpop.f32.mrf.mxu0
    %v431 = vadd.f32 %v106, %v430
    %v432 = vpop.f32.mrf.mxu0
    %433 = vmatprep.mubr.bf16.mxu0 0
    %434 = vmatmul.mubr.bf16.gmra.mxu0 %v291
    %v435 = vpop.f32.mrf.mxu0
    %v436 = vadd.f32 %v106, %v435
    %v437 = vpop.f32.mrf.mxu0
    %v438 = vpop.f32.mrf.mxu0
    %v439 = vadd.f32 %v106, %v438
    %v440 = vpop.f32.mrf.mxu0
    %441 = vmatprep.mubr.bf16.mxu0 0
    %442 = vmatmul.mubr.bf16.gmra.mxu0 %v294
    %v443 = vpop.f32.mrf.mxu0
    %v444 = vadd.f32 %v106, %v443
    %v445 = vpop.f32.mrf.mxu0
    %v446 = vpop.f32.mrf.mxu0
    %v447 = vadd.f32 %v106, %v446
    %v448 = vpop.f32.mrf.mxu0
    %449 = vmatprep.mubr.bf16.mxu0 0
    %450 = vmatmul.mubr.bf16.gmra.mxu0 %v297
    %v451 = vpop.f32.mrf.mxu0
    %v452 = vadd.f32 %v106, %v451
    %v453 = vpop.f32.mrf.mxu0
    %v454 = vpop.f32.mrf.mxu0
    %v455 = vadd.f32 %v106, %v454
    %v456 = vpop.f32.mrf.mxu0
    %457 = vmatprep.mubr.bf16.mxu0 0
    %458 = vmatmul.mubr.bf16.gmra.mxu0 %v300
    %v459 = vpop.f32.mrf.mxu0
    %v460 = vadd.f32 %v106, %v459
    %v461 = vpop.f32.mrf.mxu0
    %v462 = vpop.f32.mrf.mxu0
    %v463 = vadd.f32 %v106, %v462
    %v464 = vpop.f32.mrf.mxu0
    %465 = vmatprep.mubr.bf16.mxu0 0
    %466 = vmatmul.mubr.bf16.gmra.mxu0 %v303
    %v467 = vpop.f32.mrf.mxu0
    %v468 = vadd.f32 %v106, %v467
    %v469 = vpop.f32.mrf.mxu0
    %v470 = vpop.f32.mrf.mxu0
    %v471 = vadd.f32 %v106, %v470
    %v472 = vpop.f32.mrf.mxu0
    %473 = vmatprep.mubr.bf16.mxu0 0
    %474 = vmatmul.mubr.bf16.gmra.mxu0 %v306
    %v475 = vpop.f32.mrf.mxu0
    %v476 = vadd.f32 %v106, %v475
    %v477 = vpop.f32.mrf.mxu0
    %v478 = vpop.f32.mrf.mxu0
    %v479 = vadd.f32 %v106, %v478
    %v480 = vpop.f32.mrf.mxu0
    %481 = vmatprep.mubr.bf16.mxu0 0
    %482 = vmatmul.mubr.bf16.gmra.mxu0 %v309
    %v483 = vpop.f32.mrf.mxu0
    %v484 = vadd.f32 %v106, %v483
    %v485 = vpop.f32.mrf.mxu0
    %v486 = vpop.f32.mrf.mxu0
    %v487 = vadd.f32 %v106, %v486
    %v488 = vpop.f32.mrf.mxu0
    %489 = vmatprep.mubr.bf16.mxu0 0
    %490 = vmatmul.mubr.bf16.gmra.mxu0 %v312
    %v491 = vpop.f32.mrf.mxu0
    %v492 = vadd.f32 %v106, %v491
    %v493 = vpop.f32.mrf.mxu0
    %v494 = vpop.f32.mrf.mxu0
    %v495 = vadd.f32 %v106, %v494
    %v496 = vpop.f32.mrf.mxu0
    %497 = vmatprep.mubr.bf16.mxu0 0
    %498 = vmatmul.mubr.bf16.gmra.mxu0 %v315
    %v499 = vpop.f32.mrf.mxu0
    %v500 = vadd.f32 %v106, %v499
    %v501 = vpop.f32.mrf.mxu0
    %v502 = vpop.f32.mrf.mxu0
    %v503 = vadd.f32 %v106, %v502
    %v504 = vpop.f32.mrf.mxu0
    %505 = vmatprep.mubr.bf16.mxu0 0
    %506 = vmatmul.mubr.bf16.gmra.mxu0 %v318
    %v507 = vpop.f32.mrf.mxu0
    %v508 = vadd.f32 %v106, %v507
    %v509 = vpop.f32.mrf.mxu0
    %v510 = vpop.f32.mrf.mxu0
    %v511 = vadd.f32 %v106, %v510
    %v512 = vpop.f32.mrf.mxu0
    %513 = vmatprep.mubr.bf16.mxu0 0
    %514 = vmatmul.mubr.bf16.gmra.mxu0 %v321
    %v515 = vpop.f32.mrf.mxu0
    %v516 = vadd.f32 %v106, %v515
    %v517 = vpop.f32.mrf.mxu0
    %v518 = vpop.f32.mrf.mxu0
    %v519 = vadd.f32 %v106, %v518
    %v520 = vpop.f32.mrf.mxu0
    %521 = vmatprep.mubr.bf16.mxu0 0
    %522 = vmatmul.mubr.bf16.gmra.mxu0 %v324
    %v523 = vpop.f32.mrf.mxu0
    %v524 = vadd.f32 %v106, %v523
    %v525 = vpop.f32.mrf.mxu0
    %v526 = vpop.f32.mrf.mxu0
    %v527 = vadd.f32 %v106, %v526
    %v528 = vpop.f32.mrf.mxu0
    %529 = vmatprep.mubr.bf16.mxu0 0
    %530 = vmatmul.mubr.bf16.gmra.mxu0 %v327
    %v531 = vpop.f32.mrf.mxu0
    %v532 = vadd.f32 %v106, %v531
    %v533 = vpop.f32.mrf.mxu0
    %v534 = vpop.f32.mrf.mxu0
    %v535 = vadd.f32 %v106, %v534
    %v536 = vpop.f32.mrf.mxu0
    %537 = vmatprep.mubr.bf16.mxu0 0
    %538 = vmatmul.mubr.bf16.gmra.mxu0 %v330
    %v539 = vpop.f32.mrf.mxu0
    %v540 = vadd.f32 %v106, %v539
    %v541 = vpop.f32.mrf.mxu0
    %v542 = vpop.f32.mrf.mxu0
    %v543 = vadd.f32 %v106, %v542
    %v544 = vpop.f32.mrf.mxu0
    %545 = vmatprep.mubr.bf16.mxu0 0
    %546 = vmatmul.mubr.bf16.gmra.mxu0 %v333
    %v547 = vpop.f32.mrf.mxu0
    %v548 = vadd.f32 %v106, %v547
    %v549 = vpop.f32.mrf.mxu0
    %v550 = vpop.f32.mrf.mxu0
    %v551 = vadd.f32 %v106, %v550
    %v552 = vpop.f32.mrf.mxu0
    %553 = vmatprep.mubr.bf16.mxu0 0
    %554 = vmatmul.mubr.bf16.gmra.mxu0 %v336
    %v555 = vpop.f32.mrf.mxu0
    %v556 = vadd.f32 %v106, %v555
    %v557 = vpop.f32.mrf.mxu0
    %v558 = vpop.f32.mrf.mxu0
    %v559 = vadd.f32 %v106, %v558
    %v560 = vpop.f32.mrf.mxu0
    %561 = vmatprep.mubr.bf16.mxu0 0
    %562 = vmatmul.mubr.bf16.gmra.mxu0 %v339
    %v563 = vpop.f32.mrf.mxu0
    %v564 = vadd.f32 %v106, %v563
    %v565 = vpop.f32.mrf.mxu0
    %v566 = vpop.f32.mrf.mxu0
    %v567 = vadd.f32 %v106, %v566
    %v568 = vpop.f32.mrf.mxu0
    %569 = vmatprep.mubr.bf16.mxu0 0
    %570 = vmatmul.mubr.bf16.gmra.mxu0 %v342
    %v571 = vpop.f32.mrf.mxu0
    %v572 = vadd.f32 %v106, %v571
    %v573 = vpop.f32.mrf.mxu0
    %v574 = vpop.f32.mrf.mxu0
    %v575 = vadd.f32 %v106, %v574
    %v576 = vpop.f32.mrf.mxu0
    %577 = vmatprep.mubr.bf16.mxu0 0
    %578 = vmatmul.mubr.bf16.gmra.mxu0 %v345
    %v579 = vpop.f32.mrf.mxu0
    %v580 = vadd.f32 %v106, %v579
    %v581 = vpop.f32.mrf.mxu0
    %v582 = vpop.f32.mrf.mxu0
    %v583 = vadd.f32 %v106, %v582
    %v584 = vpop.f32.mrf.mxu0
    %585 = vmatprep.mubr.bf16.mxu0 0
    %586 = vmatmul.mubr.bf16.gmra.mxu0 %v348
    %v587 = vpop.f32.mrf.mxu0
    %v588 = vadd.f32 %v106, %v587
    %v589 = vpop.f32.mrf.mxu0
    %v590 = vpop.f32.mrf.mxu0
    %v591 = vadd.f32 %v106, %v590
    %v592 = vpop.f32.mrf.mxu0
    %593 = vmatprep.mubr.bf16.mxu0 0
    %594 = vmatmul.mubr.bf16.gmra.mxu0 %v351
    %v595 = vpop.f32.mrf.mxu0
    %v596 = vadd.f32 %v106, %v595
    %v597 = vpop.f32.mrf.mxu0
    %v598 = vpop.f32.mrf.mxu0
    %v599 = vadd.f32 %v106, %v598
    %v600 = vpop.f32.mrf.mxu0
    %601 = vmatprep.mubr.bf16.mxu0 0
    %602 = vmatmul.mubr.bf16.gmra.mxu0 %v354
    %v603 = vpop.f32.mrf.mxu0
    %v604 = vadd.f32 %v106, %v603
    %v605 = vpop.f32.mrf.mxu0
    %v606 = vpop.f32.mrf.mxu0
    %v607 = vadd.f32 %v106, %v606
    %v608 = vpop.f32.mrf.mxu0
    %609 = vmatprep.mubr.bf16.mxu0 0
    %610 = vmatmul.mubr.bf16.gmra.mxu0 %v357
    %v611 = vpop.f32.mrf.mxu0
    %v612 = vadd.f32 %v106, %v611
    %v613 = vpop.f32.mrf.mxu0
    %v614 = vpop.f32.mrf.mxu0
    %v615 = vadd.f32 %v106, %v614
    %v616 = vpop.f32.mrf.mxu0
    %617 = vmatprep.mubr.bf16.mxu0 0
    %618 = vmatmul.mubr.bf16.gmra.mxu0 %v360
    %v619 = vpop.f32.mrf.mxu0
    %v620 = vadd.f32 %v106, %v619
    %v621 = vpop.f32.mrf.mxu0
    %v622 = vpop.f32.mrf.mxu0
    %v623 = vadd.f32 %v106, %v622
    %v624 = vpop.f32.mrf.mxu0
    %625 = vmatprep.mubr.bf16.mxu0 0
    %626 = vmatmul.mubr.bf16.gmra.mxu0 %v363
    %v627 = vpop.f32.mrf.mxu0
    %v628 = vadd.f32 %v106, %v627
    %v629 = vpop.f32.mrf.mxu0
    %v630 = vpop.f32.mrf.mxu0
    %v631 = vadd.f32 %v106, %v630
    %v632 = vpop.f32.mrf.mxu0
    %633 = vmatprep.mubr.bf16.mxu0 0
    %634 = vmatmul.mubr.bf16.gmra.mxu0 %v366
    %v635 = vpop.f32.mrf.mxu0
    %v636 = vadd.f32 %v106, %v635
    %v637 = vpop.f32.mrf.mxu0
    %v638 = vpop.f32.mrf.mxu0
    %v639 = vadd.f32 %v106, %v638
    %v640 = vpop.f32.mrf.mxu0
    %641 = vmatprep.mubr.bf16.mxu0 0
    %642 = vmatmul.mubr.bf16.gmra.mxu0 %v369
    %v643 = vpop.f32.mrf.mxu0
    %v644 = vadd.f32 %v106, %v643
    %v645 = vpop.f32.mrf.mxu0
    %v646 = vpop.f32.mrf.mxu0
    %v647 = vadd.f32 %v106, %v646
    %v648 = vpop.f32.mrf.mxu0
    %649 = vmatprep.mubr.bf16.mxu0 0
    %650 = vmatmul.mubr.bf16.gmra.mxu0 %v372
    %v651 = vpop.f32.mrf.mxu0
    %v652 = vadd.f32 %v106, %v651
    %v653 = vpop.f32.mrf.mxu0
    %v654 = vpop.f32.mrf.mxu0
    %v655 = vadd.f32 %v106, %v654
    %v656 = vpop.f32.mrf.mxu0
    %657 = vmatprep.mubr.bf16.mxu0 0
    %658 = vmatmul.mubr.bf16.gmra.mxu0 %v375
    %v659 = vpop.f32.mrf.mxu0
    %v660 = vadd.f32 %v106, %v659
    %v661 = vpop.f32.mrf.mxu0
    %v662 = vpop.f32.mrf.mxu0
    %v663 = vadd.f32 %v106, %v662
    %v664 = vpop.f32.mrf.mxu0
    %665 = vdwg.mxu0
    %v666 = vmax.f32 %v412, 0.0
    %v667 = vmax.f32 %v415, 0.0
    %v668 = vmax.f32 %v420, 0.0
    %v669 = vmax.f32 %v423, 0.0
    %v670 = vmax.f32 %v428, 0.0
    %v671 = vmax.f32 %v431, 0.0
    %v672 = vmax.f32 %v436, 0.0
    %v673 = vmax.f32 %v439, 0.0
    %v674 = vmax.f32 %v444, 0.0
    %v675 = vmax.f32 %v447, 0.0
    %v676 = vmax.f32 %v452, 0.0
    %v677 = vmax.f32 %v455, 0.0
    %v678 = vmax.f32 %v460, 0.0
    %v679 = vmax.f32 %v463, 0.0
    %v680 = vmax.f32 %v468, 0.0
    %v681 = vmax.f32 %v471, 0.0
    %v682 = vmax.f32 %v476, 0.0
    %v683 = vmax.f32 %v479, 0.0
    %v684 = vmax.f32 %v484, 0.0
    %v685 = vmax.f32 %v487, 0.0
    %v686 = vmax.f32 %v492, 0.0
    %v687 = vmax.f32 %v495, 0.0
    %v688 = vmax.f32 %v500, 0.0
    %v689 = vmax.f32 %v503, 0.0
    %v690 = vmax.f32 %v508, 0.0
    %v691 = vmax.f32 %v511, 0.0
    %v692 = vmax.f32 %v516, 0.0
    %v693 = vmax.f32 %v519, 0.0
    %v694 = vmax.f32 %v524, 0.0
    %v695 = vmax.f32 %v527, 0.0
    %v696 = vmax.f32 %v532, 0.0
    %v697 = vmax.f32 %v535, 0.0
    %v698 = vmax.f32 %v540, 0.0
    %v699 = vmax.f32 %v543, 0.0
    %v700 = vmax.f32 %v548, 0.0
    %v701 = vmax.f32 %v551, 0.0
    %v702 = vmax.f32 %v556, 0.0
    %v703 = vmax.f32 %v559, 0.0
    %v704 = vmax.f32 %v564, 0.0
    %v705 = vmax.f32 %v567, 0.0
    %v706 = vmax.f32 %v572, 0.0
    %v707 = vmax.f32 %v575, 0.0
    %v708 = vmax.f32 %v580, 0.0
    %v709 = vmax.f32 %v583, 0.0
    %v710 = vmax.f32 %v588, 0.0
    %v711 = vmax.f32 %v591, 0.0
    %v712 = vmax.f32 %v596, 0.0
    %v713 = vmax.f32 %v599, 0.0
    %v714 = vmax.f32 %v604, 0.0
    %v715 = vmax.f32 %v607, 0.0
    %v716 = vmax.f32 %v612, 0.0
    %v717 = vmax.f32 %v615, 0.0
    %v718 = vmax.f32 %v620, 0.0
    %v719 = vmax.f32 %v623, 0.0
    %v720 = vmax.f32 %v628, 0.0
    %v721 = vmax.f32 %v631, 0.0
    %v722 = vmax.f32 %v636, 0.0
    %v723 = vmax.f32 %v639, 0.0
    %v724 = vmax.f32 %v644, 0.0
    %v725 = vmax.f32 %v647, 0.0
    %v726 = vmax.f32 %v652, 0.0
    %v727 = vmax.f32 %v655, 0.0
    %v728 = vmax.f32 %v660, 0.0
    %v729 = vmax.f32 %v663, 0.0
    %v730 = vld [vmem:[%s1] sm:$0xf]
    %v731 = vpack.c.bf16 %v667, %v666
    %v732 = vpack.c.bf16 %v669, %v668
    %v733 = vpack.c.bf16 %v671, %v670
    %v734 = vpack.c.bf16 %v673, %v672
    %v735 = vpack.c.bf16 %v675, %v674
    %v736 = vpack.c.bf16 %v677, %v676
    %v737 = vpack.c.bf16 %v679, %v678
    %v738 = vpack.c.bf16 %v681, %v680
    %v739 = vpack.c.bf16 %v683, %v682
    %v740 = vpack.c.bf16 %v685, %v684
    %v741 = vpack.c.bf16 %v687, %v686
    %v742 = vpack.c.bf16 %v689, %v688
    %v743 = vpack.c.bf16 %v691, %v690
    %v744 = vpack.c.bf16 %v693, %v692
    %v745 = vpack.c.bf16 %v695, %v694
    %v746 = vpack.c.bf16 %v697, %v696
    %v747 = vpack.c.bf16 %v699, %v698
    %v748 = vpack.c.bf16 %v701, %v700
    %v749 = vpack.c.bf16 %v703, %v702
    %v750 = vpack.c.bf16 %v705, %v704
    %v751 = vpack.c.bf16 %v707, %v706
    %v752 = vpack.c.bf16 %v709, %v708
    %v753 = vpack.c.bf16 %v711, %v710
    %v754 = vpack.c.bf16 %v713, %v712
    %v755 = vpack.c.bf16 %v715, %v714
    %v756 = vpack.c.bf16 %v717, %v716
    %v757 = vpack.c.bf16 %v719, %v718
    %v758 = vpack.c.bf16 %v721, %v720
    %v759 = vpack.c.bf16 %v723, %v722
    %v760 = vpack.c.bf16 %v725, %v724
    %v761 = vpack.c.bf16 %v727, %v726
    %v762 = vpack.c.bf16 %v729, %v728
    %v765 = vunpack.c.l.s4 1966171168
    %v766 = vunpack.c.0.s8 %v765
    %v767 = vlaneseq
    %v768 = vshrl.u32 %v767, 7
    %v769 = vsub.s32 %v766, %v768
    %v770 = vrot.slane %v730, %v769
    %v771 = vcombine.high %v770, %v770
    %v773 = vunpack.c.l.s4 1966171168
    %v774 = vunpack.c.0.s8 %v773
    %v775 = vlaneseq
    %v776 = vshrl.u32 %v775, 7
    %v777 = vsub.s32 %v774, %v776
    %v778 = vrot.slane %v770, %v777
    %v780 = vunpack.c.l.s4 1966171168
    %v781 = vunpack.c.0.s8 %v780
    %v782 = vlaneseq
    %v783 = vshrl.u32 %v782, 7
    %v784 = vsub.s32 %v781, %v783
    %v785 = vrot.slane %v771, %v784
    %v786 = vcombine.high %v778, %v778
    %v787 = vcombine.high %v785, %v785
    %792 = vmatprep.subr.bf16.mxu0 0
    %793 = vmatpush1.bf16.msra.mxu0 %v738
    %794 = vmatprep.subr.bf16.mxu0 0
    %795 = vmatpush1.bf16.msra.mxu0 %v737
    %796 = vmatprep.subr.bf16.mxu0 0
    %797 = vmatpush1.bf16.msra.mxu0 %v736
    %798 = vmatprep.subr.bf16.mxu0 0
    %799 = vmatpush1.bf16.msra.mxu0 %v735
    %800 = vmatprep.subr.bf16.mxu0 0
    %801 = vmatpush1.bf16.msra.mxu0 %v734
    %802 = vmatprep.subr.bf16.mxu0 0
    %803 = vmatpush1.bf16.msra.mxu0 %v733
    %804 = vmatprep.subr.bf16.mxu0 0
    %805 = vmatpush1.bf16.msra.mxu0 %v732
    %806 = vmatprep.subr.bf16.mxu0 0
    %807 = vmatpush1.bf16.msra.mxu0 %v731
    %808 = vmatprep.subr.bf16.mxu0 0
    %809 = vmatpush2.bf16.msra.mxu0 %v746
    %810 = vmatprep.subr.bf16.mxu0 0
    %811 = vmatpush2.bf16.msra.mxu0 %v745
    %812 = vmatprep.subr.bf16.mxu0 0
    %813 = vmatpush2.bf16.msra.mxu0 %v744
    %814 = vmatprep.subr.bf16.mxu0 0
    %815 = vmatpush2.bf16.msra.mxu0 %v743
    %816 = vmatprep.subr.bf16.mxu0 0
    %817 = vmatpush2.bf16.msra.mxu0 %v742
    %818 = vmatprep.subr.bf16.mxu0 0
    %819 = vmatpush2.bf16.msra.mxu0 %v741
    %820 = vmatprep.subr.bf16.mxu0 0
    %821 = vmatpush2.bf16.msra.mxu0 %v740
    %822 = vmatprep.subr.bf16.mxu0 0
    %823 = vmatpush2.bf16.msra.mxu0 %v739
    %824 = vmatprep.mubr.bf16.mxu0 %v785
    %825 = vmatmul.mubr.bf16.gmra.mxu0 %v778
    %v826 = vpop.f32.mrf.mxu0
    %v827 = vadd.f32 0.0, %v826
    %v828 = vpop.f32.mrf.mxu0
    %v829 = vpop.f32.mrf.mxu0
    %v830 = vpop.f32.mrf.mxu0
    %831 = vdwg.mxu0
    %832 = vmatprep.subr.bf16.mxu0 0
    %833 = vmatpush1.bf16.msra.mxu0 %v754
    %834 = vmatprep.subr.bf16.mxu0 0
    %835 = vmatpush1.bf16.msra.mxu0 %v753
    %836 = vmatprep.subr.bf16.mxu0 0
    %837 = vmatpush1.bf16.msra.mxu0 %v752
    %838 = vmatprep.subr.bf16.mxu0 0
    %839 = vmatpush1.bf16.msra.mxu0 %v751
    %840 = vmatprep.subr.bf16.mxu0 0
    %841 = vmatpush1.bf16.msra.mxu0 %v750
    %842 = vmatprep.subr.bf16.mxu0 0
    %843 = vmatpush1.bf16.msra.mxu0 %v749
    %844 = vmatprep.subr.bf16.mxu0 0
    %845 = vmatpush1.bf16.msra.mxu0 %v748
    %846 = vmatprep.subr.bf16.mxu0 0
    %847 = vmatpush1.bf16.msra.mxu0 %v747
    %848 = vmatprep.subr.bf16.mxu0 0
    %849 = vmatpush2.bf16.msra.mxu0 %v762
    %850 = vmatprep.subr.bf16.mxu0 0
    %851 = vmatpush2.bf16.msra.mxu0 %v761
    %852 = vmatprep.subr.bf16.mxu0 0
    %853 = vmatpush2.bf16.msra.mxu0 %v760
    %854 = vmatprep.subr.bf16.mxu0 0
    %855 = vmatpush2.bf16.msra.mxu0 %v759
    %856 = vmatprep.subr.bf16.mxu0 0
    %857 = vmatpush2.bf16.msra.mxu0 %v758
    %858 = vmatprep.subr.bf16.mxu0 0
    %859 = vmatpush2.bf16.msra.mxu0 %v757
    %860 = vmatprep.subr.bf16.mxu0 0
    %861 = vmatpush2.bf16.msra.mxu0 %v756
    %862 = vmatprep.subr.bf16.mxu0 0
    %863 = vmatpush2.bf16.msra.mxu0 %v755
    %864 = vmatprep.mubr.bf16.mxu0 %v787
    %865 = vmatmul.mubr.bf16.gmra.mxu0 %v786
    %v866 = vpop.f32.mrf.mxu0
    %v867 = vadd.f32 %v827, %v866
    %v868 = vpop.f32.mrf.mxu0
    %v869 = vpop.f32.mrf.mxu0
    %v870 = vpop.f32.mrf.mxu0
    %871 = vdwg.mxu0
    %v872 = vpack.c.bf16 %v867, %v867
    %v873 = vld [vmem:[%s4] sm:$0xff]
    %v874 = vld [vmem:[%s4 + $0x8] sm:$0xff]
    %v875 = vld [vmem:[%s4 + $0x10] sm:$0xff]
    %v876 = vld [vmem:[%s4 + $0x18] sm:$0xff]
    %v877 = vld [vmem:[%s4 + $0x20] sm:$0xff]
    %v878 = vld [vmem:[%s4 + $0x28] sm:$0xff]
    %v879 = vld [vmem:[%s4 + $0x30] sm:$0xff]
    %v880 = vld [vmem:[%s4 + $0x38] sm:$0xff]
    %v881 = vld [vmem:[%s4 + $0x40] sm:$0xff]
    %v882 = vld [vmem:[%s4 + $0x48] sm:$0xff]
    %v883 = vld [vmem:[%s4 + $0x50] sm:$0xff]
    %v884 = vld [vmem:[%s4 + $0x58] sm:$0xff]
    %v885 = vld [vmem:[%s4 + $0x60] sm:$0xff]
    %v886 = vld [vmem:[%s4 + $0x68] sm:$0xff]
    %v887 = vld [vmem:[%s4 + $0x70] sm:$0xff]
    %v888 = vld [vmem:[%s4 + $0x78] sm:$0xff]
    %v889 = vld [vmem:[%s5] sm:$0x3]
    %v891 = vlaneseq
    %v892 = vshrl.u32 %v891, 7
    %v893 = vsub.s32 0, %v892
    %v894 = vrot.slane %v889, %v893
    %v895 = vlaneseq
    %v896 = vshrl.u32 %v895, 7
    %v897 = vsub.s32 1, %v896
    %v898 = vrot.slane %v889, %v897
    %v917 = vunpack.c.l.b16 %v873
    %v918 = vunpack.c.h.b16 %v873
    %v919 = vunpack.c.l.b16 %v874
    %v920 = vunpack.c.h.b16 %v874
    %v921 = vunpack.c.l.b16 %v875
    %v922 = vunpack.c.h.b16 %v875
    %v923 = vunpack.c.l.b16 %v876
    %v924 = vunpack.c.h.b16 %v876
    %v925 = vunpack.c.l.b16 %v877
    %v926 = vunpack.c.h.b16 %v877
    %v927 = vunpack.c.l.b16 %v878
    %v928 = vunpack.c.h.b16 %v878
    %v929 = vunpack.c.l.b16 %v879
    %v930 = vunpack.c.h.b16 %v879
    %v931 = vunpack.c.l.b16 %v880
    %v932 = vunpack.c.h.b16 %v880
    %v933 = vunpack.c.l.b16 %v881
    %v934 = vunpack.c.h.b16 %v881
    %v935 = vunpack.c.l.b16 %v882
    %v936 = vunpack.c.h.b16 %v882
    %v937 = vunpack.c.l.b16 %v883
    %v938 = vunpack.c.h.b16 %v883
    %v939 = vunpack.c.l.b16 %v884
    %v940 = vunpack.c.h.b16 %v884
    %v941 = vunpack.c.l.b16 %v885
    %v942 = vunpack.c.h.b16 %v885
    %v943 = vunpack.c.l.b16 %v886
    %v944 = vunpack.c.h.b16 %v886
    %v945 = vunpack.c.l.b16 %v887
    %v946 = vunpack.c.h.b16 %v887
    %v947 = vunpack.c.l.b16 %v888
    %v948 = vunpack.c.h.b16 %v888
    %v949 = vpack.c.b16 %v919, %v917
    %v950 = vpack.c.b16 %v920, %v918
    %v951 = vpack.c.b16 %v923, %v921
    %v952 = vpack.c.b16 %v924, %v922
    %v953 = vpack.c.b16 %v927, %v925
    %v954 = vpack.c.b16 %v928, %v926
    %v955 = vpack.c.b16 %v931, %v929
    %v956 = vpack.c.b16 %v932, %v930
    %v957 = vpack.c.b16 %v935, %v933
    %v958 = vpack.c.b16 %v936, %v934
    %v959 = vpack.c.b16 %v939, %v937
    %v960 = vpack.c.b16 %v940, %v938
    %v961 = vpack.c.b16 %v943, %v941
    %v962 = vpack.c.b16 %v944, %v942
    %v963 = vpack.c.b16 %v947, %v945
    %v964 = vpack.c.b16 %v948, %v946
    %981 = vmatprep.subr.bf16.mxu0 %v964
    %982 = vmatpush1.bf16.msra.mxu0 %v963
    %983 = vmatprep.subr.bf16.mxu0 %v962
    %984 = vmatpush1.bf16.msra.mxu0 %v961
    %985 = vmatprep.subr.bf16.mxu0 %v960
    %986 = vmatpush1.bf16.msra.mxu0 %v959
    %987 = vmatprep.subr.bf16.mxu0 %v958
    %988 = vmatpush1.bf16.msra.mxu0 %v957
    %989 = vmatprep.subr.bf16.mxu0 %v956
    %990 = vmatpush1.bf16.msra.mxu0 %v955
    %991 = vmatprep.subr.bf16.mxu0 %v954
    %992 = vmatpush1.bf16.msra.mxu0 %v953
    %993 = vmatprep.subr.bf16.mxu0 %v952
    %994 = vmatpush1.bf16.msra.mxu0 %v951
    %995 = vmatprep.subr.bf16.mxu0 %v950
    %996 = vmatpush1.bf16.msra.mxu0 %v949
    %997 = vmatprep.subr.bf16.mxu0 0
    %998 = vmatpush2.bf16.msra.mxu0 0
    %999 = vmatprep.subr.bf16.mxu0 0
    %1000 = vmatpush2.bf16.msra.mxu0 0
    %1001 = vmatprep.subr.bf16.mxu0 0
    %1002 = vmatpush2.bf16.msra.mxu0 0
    %1003 = vmatprep.subr.bf16.mxu0 0
    %1004 = vmatpush2.bf16.msra.mxu0 0
    %1005 = vmatprep.subr.bf16.mxu0 0
    %1006 = vmatpush2.bf16.msra.mxu0 0
    %1007 = vmatprep.subr.bf16.mxu0 0
    %1008 = vmatpush2.bf16.msra.mxu0 0
    %1009 = vmatprep.subr.bf16.mxu0 0
    %1010 = vmatpush2.bf16.msra.mxu0 0
    %1011 = vmatprep.subr.bf16.mxu0 0
    %1012 = vmatpush2.bf16.msra.mxu0 0
    %1013 = vmatprep.mubr.bf16.mxu0 0
    %1014 = vmatmul.mubr.bf16.gmra.mxu0 %v872
    %v1015 = vpop.f32.mrf.mxu0
    %v1016 = vadd.f32 %v894, %v1015
    %v1017 = vpop.f32.mrf.mxu0
    %v1018 = vadd.f32 %v898, %v1017
    %v1019 = vpop.f32.mrf.mxu0
    %v1020 = vpop.f32.mrf.mxu0
    %1021 = vdwg.mxu0
    %v1022 = vmax.f32 %v1016, 0.0
    %v1023 = vmax.f32 %v1018, 0.0
    %v1024 = vld [vmem:[%s6] sm:$0x3]
    %v1026 = vlaneseq
    %v1027 = vshrl.u32 %v1026, 7
    %v1028 = vsub.s32 0, %v1027
    %v1029 = vrot.slane %v1024, %v1028
    %v1030 = vlaneseq
    %v1031 = vshrl.u32 %v1030, 7
    %v1032 = vsub.s32 1, %v1031
    %v1033 = vrot.slane %v1024, %v1032
    %v1036 = vmul.f32 %v1022, %v1029
    %v1037 = vmul.f32 %v1023, %v1033
    %vm1038 = vcmask 1041408
    %v1039 = vsel %vm1038, %v1036, 0.0
    %v1040 = vsel %vm1038, %v1037, 0.0
    %v1041 = vadd.f32 %v1039, %v1040
    %1042 = vadd.xlane.f32.xlu0 %v1041
    %v1043 = vpop.xlane.xlu0 %1042
    %v1044 = vld [vmem:[#allocation2] sm:$0x1]
    %v1046 = vlaneseq
    %v1047 = vshrl.u32 %v1046, 7
    %v1048 = vsub.s32 0, %v1047
    %v1049 = vrot.slane %v1044, %v1048
    %v1051 = vadd.f32 %v1043, %v1049
    %1053 = vset.pattern.permute.xlu0 0
    %1054 = vperm.xlu0 %1053, %v1051
    %v1055 = vpop.permute.xlu0 %1054
    %1057 = vst [vmem:[#allocation3] sm:$0x3] %v1055
    // Predicated region
    $region34: #{tpu_custom_call.1} parent=1 // pred_check
      _
    $region35: #{tpu_custom_call.1} parent=1 // pred_check_branch
      %1059 = sbr.rel (0) target = $region37
    $region36: #{tpu_custom_call.1} parent=1 // pred_region
      %s1061 = ssub.s32 32, 32
      %1062 = vsyncadd [#allocation4], %s1061
      %s1064 = sshll.u32 [#allocation3], 4
      %s1065 = int_to_ptr.vmem [resolvable:$true] %s1064
      %1067 = dma.vmem_to_hbm [thread:$0]  %s1065, 32, %s8, [#allocation4]
    $region37: #{tpu_custom_call.1} parent=1 // pred_fallthru
      _
    // Predicated region
    $region38: #{tpu_custom_call.1} parent=1 // pred_check
      _
    $region39: #{tpu_custom_call.1} parent=1 // pred_check_branch
      %1069 = sbr.rel (0) target = $region41
    $region40: #{tpu_custom_call.1} parent=1 // pred_region
      %1070 = dma.done [#allocation4], 32
    $region41: #{tpu_custom_call.1} parent=1 // pred_fallthru
      _
    %1071 = vsyncpa [#allocation4], 1

</llo_original>
